<compile_context>
chip_gen: v5e
topology: v5e:2x2
jax: 0.10.0
libtpu: 0.0.40
codegen_flags: <defaults>
</compile_context>

<pallas_src>
import jax
import jax.numpy as jnp
from jax.experimental import pallas as pl
from jax.experimental.pallas import tpu as pltpu


def _round_up(x, m):
    return ((x + m - 1) // m) * m


# --------------------------- scoring kernel ----------------------------------
def _make_score_kernel(TB):
    def kernel(q_ref, e_ref, pred_ref):
        # grid = (entity tiles [parallel, outer], batch tiles [arbitrary, inner])
        i = pl.program_id(1)                         # batch-tile index
        row0 = pl.multiple_of(i * TB, TB)
        q_tile = q_ref[pl.ds(row0, TB), :]           # q resident in VMEM; slice rows

        # (TB, D) x (TE, D) contracted on D -> (TB, TE); no transpose needed.
        scores = jax.lax.dot_general(
            q_tile, e_ref[...],
            dimension_numbers=(((1,), (1,)), ((), ())),
            preferred_element_type=jnp.float32)

        pred_ref[...] = jax.nn.sigmoid(scores).astype(pred_ref.dtype)

    return kernel


# ---------------------------------- wrapper ----------------------------------
def distmult_forward(e1, rel, emb_e, emb_rel, *,
                     tile_e=4096, tile_b=256, out_dtype=jnp.bfloat16):
    """pred = sigmoid((emb_e[e1] * emb_rel[rel]) @ emb_e.T)  (eval mode)."""
    B = e1.shape[0]
    E, D = emb_e.shape

    # TODO(synk): inp_drop (Dropout) is an eval-mode identity here (no RNG dropout).
    # Query side is a (B, D) gather + elementwise product -> leave it to XLA
    # (a dedicated Pallas pass would cost more in launch + HBM round trip).
    q = jnp.take(emb_e, e1, axis=0) * jnp.take(emb_rel, rel, axis=0)      # f32

    # ---- tiling ----
    # Batch tile: multiple of 16 (native bf16 sublane tile).
    TB = min(_round_up(tile_b, 16), _round_up(B, 16))
    B_pad = _round_up(B, TB)
    n_b = B_pad // TB

    # Entity tile: big (amortize per-step overhead, lane-dense stores), but
    # keep >= 2 tiles when E >= 256 (v7x 2-TC split of the parallel axis) and
    # cap the double-buffered tile so it stays well inside VMEM.
    tile_e = _round_up(tile_e, 128)
    E_128 = _round_up(E, 128)
    TE = min(tile_e, E_128)
    if TE >= E_128 and E_128 >= 256:
        TE = _round_up((E_128 + 1) // 2, 128)
    while TE > 128 and TE * D * 2 > 12 * 1024 * 1024:     # per-buffer cap
        TE = _round_up(TE // 2, 128)
    E_pad = _round_up(E, TE)
    n_e = E_pad // TE

    # bf16 MXU operands (f32 accumulation inside the kernel); zero padding is
    # exact: padded rows/cols produce sigmoid(0)=0.5 and are sliced off below.
    q_bf = jnp.pad(q, ((0, B_pad - B), (0, 0))).astype(jnp.bfloat16)
    emb_e_bf = jnp.pad(emb_e, ((0, E_pad - E), (0, 0))).astype(jnp.bfloat16)

    out_bytes = jnp.dtype(out_dtype).itemsize
    cost = pl.CostEstimate(
        flops=2 * B_pad * E_pad * D,
        transcendentals=B_pad * E_pad,
        bytes_accessed=(E_pad * D * 2           # entity stream (bf16, read once)
                        + B_pad * D * 2         # q (resident, read once)
                        + B_pad * E_pad * out_bytes))   # pred writeback (dominant)

    pred = pl.pallas_call(
        _make_score_kernel(TB),
        out_shape=jax.ShapeDtypeStruct((B_pad, E_pad), out_dtype),
        grid=(n_e, n_b),
        in_specs=[
            # q: whole array, constant index_map -> DMA'd once, stays in VMEM.
            pl.BlockSpec((B_pad, D), lambda j, i: (0, 0)),
            # entity tile: changes only with the outer (entity) axis -> each
            # tile is fetched exactly once.
            pl.BlockSpec((TE, D), lambda j, i: (j, 0)),
        ],
        out_specs=pl.BlockSpec((TB, TE), lambda j, i: (i, j)),
        compiler_params=pltpu.CompilerParams(
            # entity axis split across v7x's 2 TensorCores; batch axis inner.
            dimension_semantics=("parallel", "arbitrary"),
            vmem_limit_bytes=48 * 1024 * 1024),
        cost_estimate=cost,
    )(q_bf, emb_e_bf)

    return pred[:B, :E]


# ------------------------------------ main ------------------------------------
if __name__ == "__main__":
    # Small deterministic config (Config.embedding_dim -> 32).  E chosen so the
    # kernel exercises 2 entity tiles plus padding on both axes.
    num_entities = 384
    num_relations = 16
    emb_dim = 32
    batch = 20

    key = jax.random.PRNGKey(0)
    k_e, k_r, k_e1, k_rel = jax.random.split(key, 4)

    # Embedding tables (xavier-normal-ish init, padding_idx=0 row zeroed).
    emb_e = jax.random.normal(k_e, (num_entities, emb_dim), jnp.float32) * 0.1
    emb_e = emb_e.at[0].set(0.0)
    emb_rel = jax.random.normal(k_r, (num_relations, emb_dim), jnp.float32) * 0.1
    emb_rel = emb_rel.at[0].set(0.0)

    e1 = jax.random.randint(k_e1, (batch,), 0, num_entities, jnp.int32)
    rel = jax.random.randint(k_rel, (batch,), 0, num_relations, jnp.int32)

    pred = distmult_forward(e1, rel, emb_e, emb_rel)
    pred = jax.block_until_ready(pred)

    # Pure-JAX f32 reference (eval mode: dropout = identity).
    q_ref = jnp.take(emb_e, e1, axis=0) * jnp.take(emb_rel, rel, axis=0)
    ref = jax.nn.sigmoid(q_ref @ emb_e.T)

    pred_f32 = pred.astype(jnp.float32)
    assert pred.shape == (batch, num_entities)
    assert bool(jnp.all((pred_f32 >= 0.0) & (pred_f32 <= 1.0)))
    err = float(jnp.max(jnp.abs(pred_f32 - ref)))
    # bf16 scoring + bf16 pred vs f32 reference: well within 1e-2 at emb_dim=32.
    assert err < 1e-2, f"mismatch vs reference: {err}"
    print("KERNEL_OK")
</pallas_src>

<mosaic_0001>
module attributes {stable_mosaic.version = 11 : i64} {
  func.func @kernel(%arg0: i32, %arg1: i32, %arg2: memref<32x32xbf16, #tpu.memory_space<vmem>>, %arg3: memref<256x32xbf16, #tpu.memory_space<vmem>>, %arg4: memref<32x256xbf16, #tpu.memory_space<vmem>>) attributes {dimension_semantics = [#tpu.dimension_semantics<parallel>, #tpu.dimension_semantics<arbitrary>], iteration_bounds = array<i64: 2, 1>, scalar_prefetch = 0 : i64, scratch_operands = 0 : i64, tpu.core_type = #tpu.core_type<tc>, window_params = [{pipeline_mode = #tpu.pipeline_mode<synchronous>, transform_indices = @transform_0, window_bounds = array<i64: 32, 32>}, {transform_indices = @transform_1, window_bounds = array<i64: 256, 32>}, {transform_indices = @transform_2, window_bounds = array<i64: 32, 256>}]} {
    %c32_i32 = arith.constant 32 : i32
    %0 = arith.muli %arg1, %c32_i32 : i32
    %1 = tpu.assume_multiple %0, 32 : i32
    %2 = arith.index_cast %1 : i32 to index
    %c0 = arith.constant 0 : index
    %3 = vector.load %arg2[%2, %c0] : memref<32x32xbf16, #tpu.memory_space<vmem>>, vector<32x32xbf16>
    %c0_0 = arith.constant 0 : index
    %c0_1 = arith.constant 0 : index
    %4 = vector.load %arg3[%c0_0, %c0_1] : memref<256x32xbf16, #tpu.memory_space<vmem>>, vector<256x32xbf16>
    %cst = arith.constant dense<0.000000e+00> : vector<32x256xf32>
    %5 = tpu.matmul %3, %4, %cst {dimension_numbers = #tpu.dot_dimension_numbers<[1], [1], [0], [0], [0, 0, 1, 0], [], []>} : vector<32x32xbf16>, vector<256x32xbf16>, vector<32x256xf32> -> vector<32x256xf32>
    %6 = arith.negf %5 : vector<32x256xf32>
    %7 = math.exp %6 : vector<32x256xf32>
    %cst_2 = arith.constant 1.000000e+00 : f32
    %8 = vector.broadcast %cst_2 : f32 to vector<32x256xf32>
    %9 = arith.addf %8, %7 : vector<32x256xf32>
    %10 = arith.divf %8, %9 : vector<32x256xf32>
    %11 = arith.truncf %10 : vector<32x256xf32> to vector<32x256xbf16>
    %c0_3 = arith.constant 0 : index
    %c0_4 = arith.constant 0 : index
    %12 = vector.load %arg4[%c0_3, %c0_4] : memref<32x256xbf16, #tpu.memory_space<vmem>>, vector<32x256xbf16>
    tpu.vector_store %arg4[%c0_3, %c0_4], %11 {strides = array<i32>} : memref<32x256xbf16, #tpu.memory_space<vmem>>, vector<32x256xbf16>,
    return
  }
  func.func @transform_0(%arg0: i32, %arg1: i32) -> (i32, i32) {
    %c0_i32 = arith.constant 0 : i32
    %c0_i32_0 = arith.constant 0 : i32
    %c0_i32_1 = arith.constant 0 : i32
    return %c0_i32, %c0_i32_0 : i32, i32
  }
  func.func @transform_1(%arg0: i32, %arg1: i32) -> (i32, i32) {
    %c0_i32 = arith.constant 0 : i32
    %c0_i32_0 = arith.constant 0 : i32
    return %arg0, %c0_i32 : i32, i32
  }
  func.func @transform_2(%arg0: i32, %arg1: i32) -> (i32, i32) {
    %c0_i32 = arith.constant 0 : i32
    return %arg1, %arg0 : i32, i32
  }
}

</mosaic_0001>

<llo_original>
// kernel: tpu_custom_call.1
$region0: #{tpu_custom_call.1}
  #allocation0 [shape = 'u32[]', space=smem, size = 0x4, offset = 0x4, fixed_abs, tag = 'smem constant byte address 0x4 - core index']
  #allocation1 [shape = 'u32[72,128]{1,0:T(1,128)}', space=vmem, size = 0x9000, scoped, tag = 'internal scratch']
  %s0 = inlined_call_operand.vmem [shape: bf16[32,32], index: 0, kind: input, shape index: {}]
  %s1 = inlined_call_operand.vmem [shape: bf16[512,32], index: 1, kind: input, shape index: {}]
  %s2 = inlined_call_operand.hbm [shape: bf16[32,512], index: 2, kind: output, shape index: {}]
  %s3 = sld [smem:[#allocation0]]
  $region41: #{tpu_custom_call.1} parent=0
    _
  %s5 = ssub.s32 1, %s3
  %s6 = scalar_select 0, %s5, %s3
  $region1: #{tpu_custom_call.1} parent=0
    #allocation2 [shape = 'u8[32768]{0}', space=vmem, size = 0x8000, scoped, tag = 'output window, operand 0']
    #allocation3 [shape = 's32[2]{0}', space=sflag, size = 0x8, scoped, tag = 'scoped memory for tpu_custom_call.1']
    %7 = vsyncpa [#allocation3], 0
    %s8 = scalar_lea.sflag [#allocation3], 1
    %9 = vsyncpa %s8, 0
    loop: start=0, step=1, limit=4
    $region2: #{tpu_custom_call.1} parent=1 // loop_pre_header
      _
    $region3: #{tpu_custom_call.1} parent=1 // loop_header
      %s11 = sphi 0, %s15
      %p12 = scmp.ge.s32.totalorder %s11, 4
      %s18 = sphi 0, %s30
      %s19 = sphi 0, %s26
      %s20 = sphi 0, %s18
      %s21 = sphi 0, %s19
      %s22 = sphi 0, %s20
      %s23 = sphi 0, %s21
      %s31 = sphi 0, %s31
      %s33 = sphi 0, %s31
      %s34 = sphi 0, %s33
      %s48 = sphi 0, %s34
      %s54 = sphi 0, %s56
      %s57 = sphi 0, %s54
      %s58 = sphi 0, %s57
      %s74 = sphi 0, %s58
      %s82 = sphi 0, %s84
      %s85 = sphi 0, %s82
      %s86 = sphi 0, %s85
      %s102 = sphi 0, %s86
    $region4: #{tpu_custom_call.1} parent=1 // loop_header_branch
      %14 = sbr.rel (%p12) target = $region8
    $region5: #{tpu_custom_call.1} parent=1 // loop_body
      %s16 = ssub.s32 %s11, 1
      %s17 = ssub.s32 %s11, 2
      %s24 = sadd.s32 1, %s19
      %p25 = scmp.ge.s32.totalorder %s24, 1
      %s26 = scalar_select %p25, 0, %s24
      %s27 = sadd.s32 1, %s18
      %s28 = scalar_select %p25, %s27, %s18
      %p29 = scmp.ge.s32.totalorder %s28, 2
      %s30 = scalar_select %p29, 0, %s28
      %s32 = sadd.s32 %s31, 1
      %p35 = scmp.eq.s32.totalorder %s11, 1
      %p36 = scmp.ne.s32.totalorder %s31, %s33
      %p37 = scmp.eq.s32.totalorder %s11, 0
      %p38 = por %p36, %p37
      %p39 = scmp.ne.s32.totalorder %s31, %s33
      %p40 = scmp.eq.s32.totalorder %s16, 1
      %p41 = por %p39, %p40
      %p42 = scmp.ne.s32.totalorder %s33, %s34
      %p43 = scmp.eq.s32.totalorder %s16, 0
      %p44 = por %p42, %p43
      %p45 = scmp.ne.s32.totalorder %s33, %s34
      %p46 = scmp.eq.s32.totalorder %s17, 1
      %p47 = por %p45, %p46
      %p49 = scmp.ne.s32.totalorder %s34, %s48
      %p50 = scmp.eq.s32.totalorder %s17, 0
      %p51 = por %p49, %p50
      %s52 = ssub.s32 %s18, %s30
      %p53 = scmp.eq.s32.totalorder %s52, 0
      %s55 = sadd.s32 %s54, 1
      %s56 = scalar_select %p53, %s54, %s55
      %p59 = pneg %p53
      %p60 = scmp.eq.s32.totalorder %s11, 1
      %p61 = por %p59, %p60
      %p62 = scmp.ne.s32.totalorder %s54, %s57
      %p63 = scmp.eq.s32.totalorder %s11, 0
      %p64 = por %p62, %p63
      %p65 = scmp.ne.s32.totalorder %s54, %s57
      %p66 = scmp.eq.s32.totalorder %s16, 1
      %p67 = por %p65, %p66
      %p68 = scmp.ne.s32.totalorder %s57, %s58
      %p69 = scmp.eq.s32.totalorder %s16, 0
      %p70 = por %p68, %p69
      %p71 = scmp.ne.s32.totalorder %s57, %s58
      %p72 = scmp.eq.s32.totalorder %s17, 1
      %p73 = por %p71, %p72
      %p75 = scmp.ne.s32.totalorder %s58, %s74
      %p76 = scmp.eq.s32.totalorder %s17, 0
      %p77 = por %p75, %p76
      %s78 = ssub.s32 %s19, %s26
      %s79 = ssub.s32 %s18, %s30
      %s80 = sor.u32 %s78, %s79
      %p81 = scmp.eq.s32.totalorder %s80, 0
      %s83 = sadd.s32 %s82, 1
      %s84 = scalar_select %p81, %s82, %s83
      %p87 = pneg %p81
      %p88 = scmp.eq.s32.totalorder %s11, 1
      %p89 = por %p87, %p88
      %p90 = scmp.ne.s32.totalorder %s82, %s85
      %p91 = scmp.eq.s32.totalorder %s11, 0
      %p92 = por %p90, %p91
      %p93 = scmp.ne.s32.totalorder %s82, %s85
      %p94 = scmp.eq.s32.totalorder %s16, 1
      %p95 = por %p93, %p94
      %p96 = scmp.ne.s32.totalorder %s85, %s86
      %p97 = scmp.eq.s32.totalorder %s16, 0
      %p98 = por %p96, %p97
      %p99 = scmp.ne.s32.totalorder %s85, %s86
      %p100 = scmp.eq.s32.totalorder %s17, 1
      %p101 = por %p99, %p100
      %p103 = scmp.ne.s32.totalorder %s86, %s102
      %p104 = scmp.eq.s32.totalorder %s17, 0
      %p105 = por %p103, %p104
      %p106 = scmp.le.s32.totalorder 1, %s11
      %p107 = scmp.lt.s32.totalorder %s11, 3
      %p108 = pnand %p106, %p107
      %p109 = pneg %p108
      // Predicated region
      $region9: #{tpu_custom_call.1} parent=5 // pred_check
        _
      $region10: #{tpu_custom_call.1} parent=5 // pred_check_branch
        %111 = sbr.rel (%p108) target = $region12
      $region11: #{tpu_custom_call.1} parent=5 // pred_region
        %s112 = ssub.s32 %s11, 1
        // Predicated region
        $region13: #{tpu_custom_call.1} parent=11 // pred_check
          %p113 = pneg %p44
        $region14: #{tpu_custom_call.1} parent=11 // pred_check_branch
          %115 = sbr.rel (%p113) target = $region16
        $region15: #{tpu_custom_call.1} parent=11 // pred_region
          _
        $region16: #{tpu_custom_call.1} parent=11 // pred_fallthru
          _
      $region12: #{tpu_custom_call.1} parent=5 // pred_fallthru
        _
      %p116 = scmp.lt.s32.totalorder %s11, 2
      // Predicated region
      $region17: #{tpu_custom_call.1} parent=5 // pred_check
        %p117 = pneg %p116
      $region18: #{tpu_custom_call.1} parent=5 // pred_check_branch
        %119 = sbr.rel (%p117) target = $region20
      $region19: #{tpu_custom_call.1} parent=5 // pred_region
        // Predicated region
        $region21: #{tpu_custom_call.1} parent=19 // pred_check
          %p120 = pneg %p64
        $region22: #{tpu_custom_call.1} parent=19 // pred_check_branch
          %122 = sbr.rel (%p120) target = $region24
        $region23: #{tpu_custom_call.1} parent=19 // pred_region
          %s123 = smul.u32 32, %s18
          %p124 = scmp.lt.s32.totalorder %s123, 63
          %s125 = scalar_select %p124, %s123, 63
          %s126 = smul.addr %s125, 4
          %s127 = scalar_lea.vmem %s1, %s126
          %s128 = smul.u32 32, %s18
        $region24: #{tpu_custom_call.1} parent=19 // pred_fallthru
          _
      $region20: #{tpu_custom_call.1} parent=5 // pred_fallthru
        _
      %p129 = scmp.le.s32.totalorder 1, %s11
      %p130 = scmp.lt.s32.totalorder %s11, 3
      %p131 = pnand %p129, %p130
      %p132 = pneg %p131
      // Predicated region
      $region25: #{tpu_custom_call.1} parent=5 // pred_check
        _
      $region26: #{tpu_custom_call.1} parent=5 // pred_check_branch
        %134 = sbr.rel (%p131) target = $region28
      $region27: #{tpu_custom_call.1} parent=5 // pred_region
        %s135 = ssub.s32 %s11, 1
        %p136 = pneg %p44
        %p137 = pneg %p41
        %s138 = smul.u32 32, %s20
        %p139 = scmp.lt.s32.totalorder %s138, 63
        %s140 = scalar_select %p139, %s138, 63
        %s141 = smul.addr %s140, 4
        %s142 = scalar_lea.vmem %s1, %s141
        %p143 = pneg %p70
        %p144 = pneg %p67
        %p145 = pneg %p98
        %p146 = pneg %p95
        %s147 = sand.u32 %s85, 1
        %s148 = scalar_lea.sflag [#allocation3], %s147
        %s149 = sand.u32 %s85, 1
        %s150 = smul.addr %s149, 32
        %s151 = scalar_lea.vmem [#allocation2], %s150
        %s152 = smul.u32 32, %s20
        %p153 = scmp.lt.s32.totalorder %s152, 63
        %s154 = scalar_select %p153, %s152, 63
        %s155 = smul.addr %s154, 4
        %s156 = scalar_lea.vmem %s1, %s155
        %s157 = smul.u32 32, %s20
        %s158 = smul.u32 4, %s21
        %s159 = smul.u32 2, %s20
        %s160 = smul.u32 %s21, 32
        %s161 = sshra.s32 %s160, 3
        %s162 = sand.u32 %s160, 7
        %s163 = smul.addr %s161, 4
        %s164 = scalar_lea.vmem %s0, %s163
        %v165 = vld [vmem:[%s164] sm:$0xf]
        %v166 = vld [vmem:[%s164 + $0x4] sm:$0xf]
        %v167 = vld [vmem:[%s164 + $0x8] sm:$0xf]
        %v168 = vld [vmem:[%s164 + $0xc] sm:$0xf]
        %v169 = vld [vmem:[%s156] sm:$0xf]
        %v170 = vld [vmem:[%s156 + $0x4] sm:$0xf]
        %v171 = vld [vmem:[%s156 + $0x8] sm:$0xf]
        %v172 = vld [vmem:[%s156 + $0xc] sm:$0xf]
        %v173 = vld [vmem:[%s156 + $0x10] sm:$0xf]
        %v174 = vld [vmem:[%s156 + $0x14] sm:$0xf]
        %v175 = vld [vmem:[%s156 + $0x18] sm:$0xf]
        %v176 = vld [vmem:[%s156 + $0x1c] sm:$0xf]
        %v177 = vld [vmem:[%s156 + $0x20] sm:$0xf]
        %v178 = vld [vmem:[%s156 + $0x24] sm:$0xf]
        %v179 = vld [vmem:[%s156 + $0x28] sm:$0xf]
        %v180 = vld [vmem:[%s156 + $0x2c] sm:$0xf]
        %v181 = vld [vmem:[%s156 + $0x30] sm:$0xf]
        %v182 = vld [vmem:[%s156 + $0x34] sm:$0xf]
        %v183 = vld [vmem:[%s156 + $0x38] sm:$0xf]
        %v184 = vld [vmem:[%s156 + $0x3c] sm:$0xf]
        %v185 = vld [vmem:[%s156 + $0x40] sm:$0xf]
        %v186 = vld [vmem:[%s156 + $0x44] sm:$0xf]
        %v187 = vld [vmem:[%s156 + $0x48] sm:$0xf]
        %v188 = vld [vmem:[%s156 + $0x4c] sm:$0xf]
        %v189 = vld [vmem:[%s156 + $0x50] sm:$0xf]
        %v190 = vld [vmem:[%s156 + $0x54] sm:$0xf]
        %v191 = vld [vmem:[%s156 + $0x58] sm:$0xf]
        %v192 = vld [vmem:[%s156 + $0x5c] sm:$0xf]
        %v193 = vld [vmem:[%s156 + $0x60] sm:$0xf]
        %v194 = vld [vmem:[%s156 + $0x64] sm:$0xf]
        %v195 = vld [vmem:[%s156 + $0x68] sm:$0xf]
        %v196 = vld [vmem:[%s156 + $0x6c] sm:$0xf]
        %v197 = vld [vmem:[%s156 + $0x70] sm:$0xf]
        %v198 = vld [vmem:[%s156 + $0x74] sm:$0xf]
        %v199 = vld [vmem:[%s156 + $0x78] sm:$0xf]
        %v200 = vld [vmem:[%s156 + $0x7c] sm:$0xf]
        %v205 = vunpack.c.l.b16 %v165
        %v206 = vunpack.c.l.b16 %v166
        %v207 = vunpack.c.l.b16 %v167
        %v208 = vunpack.c.l.b16 %v168
        %v209 = vpack.c.b16 %v206, %v205
        %v210 = vpack.c.b16 %v208, %v207
        %v243 = vunpack.c.l.b16 %v169
        %v244 = vunpack.c.l.b16 %v170
        %v245 = vunpack.c.l.b16 %v171
        %v246 = vunpack.c.l.b16 %v172
        %v247 = vunpack.c.l.b16 %v173
        %v248 = vunpack.c.l.b16 %v174
        %v249 = vunpack.c.l.b16 %v175
        %v250 = vunpack.c.l.b16 %v176
        %v251 = vunpack.c.l.b16 %v177
        %v252 = vunpack.c.l.b16 %v178
        %v253 = vunpack.c.l.b16 %v179
        %v254 = vunpack.c.l.b16 %v180
        %v255 = vunpack.c.l.b16 %v181
        %v256 = vunpack.c.l.b16 %v182
        %v257 = vunpack.c.l.b16 %v183
        %v258 = vunpack.c.l.b16 %v184
        %v259 = vunpack.c.l.b16 %v185
        %v260 = vunpack.c.l.b16 %v186
        %v261 = vunpack.c.l.b16 %v187
        %v262 = vunpack.c.l.b16 %v188
        %v263 = vunpack.c.l.b16 %v189
        %v264 = vunpack.c.l.b16 %v190
        %v265 = vunpack.c.l.b16 %v191
        %v266 = vunpack.c.l.b16 %v192
        %v267 = vunpack.c.l.b16 %v193
        %v268 = vunpack.c.l.b16 %v194
        %v269 = vunpack.c.l.b16 %v195
        %v270 = vunpack.c.l.b16 %v196
        %v271 = vunpack.c.l.b16 %v197
        %v272 = vunpack.c.l.b16 %v198
        %v273 = vunpack.c.l.b16 %v199
        %v274 = vunpack.c.l.b16 %v200
        %v275 = vpack.c.b16 %v244, %v243
        %v276 = vpack.c.b16 %v246, %v245
        %v277 = vpack.c.b16 %v248, %v247
        %v278 = vpack.c.b16 %v250, %v249
        %v279 = vpack.c.b16 %v252, %v251
        %v280 = vpack.c.b16 %v254, %v253
        %v281 = vpack.c.b16 %v256, %v255
        %v282 = vpack.c.b16 %v258, %v257
        %v283 = vpack.c.b16 %v260, %v259
        %v284 = vpack.c.b16 %v262, %v261
        %v285 = vpack.c.b16 %v264, %v263
        %v286 = vpack.c.b16 %v266, %v265
        %v287 = vpack.c.b16 %v268, %v267
        %v288 = vpack.c.b16 %v270, %v269
        %v289 = vpack.c.b16 %v272, %v271
        %v290 = vpack.c.b16 %v274, %v273
        %vm291 = vcmask 261120
        %v293 = vsel %vm291, %v209, 0
        %v296 = vsel %vm291, %v210, 0
        %v299 = vsel %vm291, %v275, 0
        %v302 = vsel %vm291, %v276, 0
        %v305 = vsel %vm291, %v277, 0
        %v308 = vsel %vm291, %v278, 0
        %v311 = vsel %vm291, %v279, 0
        %v314 = vsel %vm291, %v280, 0
        %v317 = vsel %vm291, %v281, 0
        %v320 = vsel %vm291, %v282, 0
        %v323 = vsel %vm291, %v283, 0
        %v326 = vsel %vm291, %v284, 0
        %v329 = vsel %vm291, %v285, 0
        %v332 = vsel %vm291, %v286, 0
        %v335 = vsel %vm291, %v287, 0
        %v338 = vsel %vm291, %v288, 0
        %v341 = vsel %vm291, %v289, 0
        %v344 = vsel %vm291, %v290, 0
        %346 = vmatpush.bf16.xpose.msra.mxu0 %v320
        %347 = vmatpush.bf16.xpose.msra.mxu0 %v317
        %348 = vmatpush.bf16.xpose.msra.mxu0 %v314
        %349 = vmatpush.bf16.xpose.msra.mxu0 %v311
        %350 = vmatpush.bf16.xpose.msra.mxu0 %v308
        %351 = vmatpush.bf16.xpose.msra.mxu0 %v305
        %352 = vmatpush.bf16.xpose.msra.mxu0 %v302
        %353 = vmatpush.bf16.xpose.msra.mxu0 %v299
        %354 = vmatmul.bf16.gmra.mxu0 %v293
        %v355 = vpop.f32.mrf.mxu0
        %v356 = vadd.f32 0.0, %v355
        %v357 = vpop.f32.mrf.mxu0
        %v358 = vadd.f32 0.0, %v357
        %359 = vmatmul.bf16.gmra.mxu0 %v296
        %v360 = vpop.f32.mrf.mxu0
        %v361 = vadd.f32 0.0, %v360
        %v362 = vpop.f32.mrf.mxu0
        %v363 = vadd.f32 0.0, %v362
        %364 = vdwg.mxu0
        %365 = vmatpush.bf16.xpose.msra.mxu0 %v344
        %366 = vmatpush.bf16.xpose.msra.mxu0 %v341
        %367 = vmatpush.bf16.xpose.msra.mxu0 %v338
        %368 = vmatpush.bf16.xpose.msra.mxu0 %v335
        %369 = vmatpush.bf16.xpose.msra.mxu0 %v332
        %370 = vmatpush.bf16.xpose.msra.mxu0 %v329
        %371 = vmatpush.bf16.xpose.msra.mxu0 %v326
        %372 = vmatpush.bf16.xpose.msra.mxu0 %v323
        %373 = vmatmul.bf16.gmra.mxu0 %v293
        %v374 = vpop.f32.mrf.mxu0
        %v375 = vadd.f32 0.0, %v374
        %v376 = vpop.f32.mrf.mxu0
        %v377 = vadd.f32 0.0, %v376
        %378 = vmatmul.bf16.gmra.mxu0 %v296
        %v379 = vpop.f32.mrf.mxu0
        %v380 = vadd.f32 0.0, %v379
        %v381 = vpop.f32.mrf.mxu0
        %v382 = vadd.f32 0.0, %v381
        %383 = vdwg.mxu0
        %v384 = vxor.u32 %v356, 2147483648
        %v385 = vxor.u32 %v375, 2147483648
        %v386 = vxor.u32 %v358, 2147483648
        %v387 = vxor.u32 %v377, 2147483648
        %v388 = vxor.u32 %v361, 2147483648
        %v389 = vxor.u32 %v380, 2147483648
        %v390 = vxor.u32 %v363, 2147483648
        %v391 = vxor.u32 %v382, 2147483648
        %v392 = vmul.f32 %v384, 1.442695
        %v393 = vpow.pop %v392
        %v394 = vmul.f32 %v385, 1.442695
        %v395 = vpow.pop %v394
        %v396 = vmul.f32 %v386, 1.442695
        %v397 = vpow.pop %v396
        %v398 = vmul.f32 %v387, 1.442695
        %v399 = vpow.pop %v398
        %v400 = vmul.f32 %v388, 1.442695
        %v401 = vpow.pop %v400
        %v402 = vmul.f32 %v389, 1.442695
        %v403 = vpow.pop %v402
        %v404 = vmul.f32 %v390, 1.442695
        %v405 = vpow.pop %v404
        %v406 = vmul.f32 %v391, 1.442695
        %v407 = vpow.pop %v406
        %v408 = vadd.f32 %v393, 1.0
        %v409 = vadd.f32 %v395, 1.0
        %v410 = vadd.f32 %v397, 1.0
        %v411 = vadd.f32 %v399, 1.0
        %v412 = vadd.f32 %v401, 1.0
        %v413 = vadd.f32 %v403, 1.0
        %v414 = vadd.f32 %v405, 1.0
        %v415 = vadd.f32 %v407, 1.0
        %v416 = vrcp.pop %v408
        %v417 = vmul.f32 %v408, %v416
        %v418 = vsub.f32 1.0, %v417
        %v419 = vmul.f32 %v416, %v418
        %v420 = vadd.f32 %v416, %v419
        %vm421 = vweird.f32 %v408
        %vm422 = vweird.f32 %v416
        %vm423 = vmor %vm421, %vm422
        %v424 = vsel %vm423, %v416, %v420
        %v425 = vand.u32 2147483647, %v408
        %vm426 = vcmp.eq.f32.partialorder %v425, 8.507059e+37
        %v427 = vand.u32 %v408, 2147483648
        %v428 = vor.u32 1.1754944e-38, %v427
        %v429 = vsel %vm426, %v428, %v424
        %v430 = vmul.f32 1.0, %v429
        %v431 = vrcp.pop %v409
        %v432 = vmul.f32 %v409, %v431
        %v433 = vsub.f32 1.0, %v432
        %v434 = vmul.f32 %v431, %v433
        %v435 = vadd.f32 %v431, %v434
        %vm436 = vweird.f32 %v409
        %vm437 = vweird.f32 %v431
        %vm438 = vmor %vm436, %vm437
        %v439 = vsel %vm438, %v431, %v435
        %v440 = vand.u32 2147483647, %v409
        %vm441 = vcmp.eq.f32.partialorder %v440, 8.507059e+37
        %v442 = vand.u32 %v409, 2147483648
        %v443 = vor.u32 1.1754944e-38, %v442
        %v444 = vsel %vm441, %v443, %v439
        %v445 = vmul.f32 1.0, %v444
        %v446 = vrcp.pop %v410
        %v447 = vmul.f32 %v410, %v446
        %v448 = vsub.f32 1.0, %v447
        %v449 = vmul.f32 %v446, %v448
        %v450 = vadd.f32 %v446, %v449
        %vm451 = vweird.f32 %v410
        %vm452 = vweird.f32 %v446
        %vm453 = vmor %vm451, %vm452
        %v454 = vsel %vm453, %v446, %v450
        %v455 = vand.u32 2147483647, %v410
        %vm456 = vcmp.eq.f32.partialorder %v455, 8.507059e+37
        %v457 = vand.u32 %v410, 2147483648
        %v458 = vor.u32 1.1754944e-38, %v457
        %v459 = vsel %vm456, %v458, %v454
        %v460 = vmul.f32 1.0, %v459
        %v461 = vrcp.pop %v411
        %v462 = vmul.f32 %v411, %v461
        %v463 = vsub.f32 1.0, %v462
        %v464 = vmul.f32 %v461, %v463
        %v465 = vadd.f32 %v461, %v464
        %vm466 = vweird.f32 %v411
        %vm467 = vweird.f32 %v461
        %vm468 = vmor %vm466, %vm467
        %v469 = vsel %vm468, %v461, %v465
        %v470 = vand.u32 2147483647, %v411
        %vm471 = vcmp.eq.f32.partialorder %v470, 8.507059e+37
        %v472 = vand.u32 %v411, 2147483648
        %v473 = vor.u32 1.1754944e-38, %v472
        %v474 = vsel %vm471, %v473, %v469
        %v475 = vmul.f32 1.0, %v474
        %v476 = vrcp.pop %v412
        %v477 = vmul.f32 %v412, %v476
        %v478 = vsub.f32 1.0, %v477
        %v479 = vmul.f32 %v476, %v478
        %v480 = vadd.f32 %v476, %v479
        %vm481 = vweird.f32 %v412
        %vm482 = vweird.f32 %v476
        %vm483 = vmor %vm481, %vm482
        %v484 = vsel %vm483, %v476, %v480
        %v485 = vand.u32 2147483647, %v412
        %vm486 = vcmp.eq.f32.partialorder %v485, 8.507059e+37
        %v487 = vand.u32 %v412, 2147483648
        %v488 = vor.u32 1.1754944e-38, %v487
        %v489 = vsel %vm486, %v488, %v484
        %v490 = vmul.f32 1.0, %v489
        %v491 = vrcp.pop %v413
        %v492 = vmul.f32 %v413, %v491
        %v493 = vsub.f32 1.0, %v492
        %v494 = vmul.f32 %v491, %v493
        %v495 = vadd.f32 %v491, %v494
        %vm496 = vweird.f32 %v413
        %vm497 = vweird.f32 %v491
        %vm498 = vmor %vm496, %vm497
        %v499 = vsel %vm498, %v491, %v495
        %v500 = vand.u32 2147483647, %v413
        %vm501 = vcmp.eq.f32.partialorder %v500, 8.507059e+37
        %v502 = vand.u32 %v413, 2147483648
        %v503 = vor.u32 1.1754944e-38, %v502
        %v504 = vsel %vm501, %v503, %v499
        %v505 = vmul.f32 1.0, %v504
        %v506 = vrcp.pop %v414
        %v507 = vmul.f32 %v414, %v506
        %v508 = vsub.f32 1.0, %v507
        %v509 = vmul.f32 %v506, %v508
        %v510 = vadd.f32 %v506, %v509
        %vm511 = vweird.f32 %v414
        %vm512 = vweird.f32 %v506
        %vm513 = vmor %vm511, %vm512
        %v514 = vsel %vm513, %v506, %v510
        %v515 = vand.u32 2147483647, %v414
        %vm516 = vcmp.eq.f32.partialorder %v515, 8.507059e+37
        %v517 = vand.u32 %v414, 2147483648
        %v518 = vor.u32 1.1754944e-38, %v517
        %v519 = vsel %vm516, %v518, %v514
        %v520 = vmul.f32 1.0, %v519
        %v521 = vrcp.pop %v415
        %v522 = vmul.f32 %v415, %v521
        %v523 = vsub.f32 1.0, %v522
        %v524 = vmul.f32 %v521, %v523
        %v525 = vadd.f32 %v521, %v524
        %vm526 = vweird.f32 %v415
        %vm527 = vweird.f32 %v521
        %vm528 = vmor %vm526, %vm527
        %v529 = vsel %vm528, %v521, %v525
        %v530 = vand.u32 2147483647, %v415
        %vm531 = vcmp.eq.f32.partialorder %v530, 8.507059e+37
        %v532 = vand.u32 %v415, 2147483648
        %v533 = vor.u32 1.1754944e-38, %v532
        %v534 = vsel %vm531, %v533, %v529
        %v535 = vmul.f32 1.0, %v534
        %v536 = vpack.c.bf16 %v445, %v430
        %v537 = vpack.c.bf16 %v475, %v460
        %v538 = vpack.c.bf16 %v505, %v490
        %v539 = vpack.c.bf16 %v535, %v520
        %540 = vst [vmem:[%s151] sm:$0xff] %v536
        %541 = vst [vmem:[%s151 + $0x8] sm:$0xff] %v537
        %542 = vst [vmem:[%s151 + $0x10] sm:$0xff] %v538
        %543 = vst [vmem:[%s151 + $0x18] sm:$0xff] %v539
        %s544 = sand.u32 %s85, 1
        %s545 = scalar_lea.sflag [#allocation3], %s544
        %s546 = sand.u32 %s85, 1
        %s547 = smul.addr %s546, 32
        %s548 = scalar_lea.vmem [#allocation2], %s547
        // Predicated region
        $region29: #{tpu_custom_call.1} parent=27 // pred_check
          %p549 = pneg %p95
        $region30: #{tpu_custom_call.1} parent=27 // pred_check_branch
          %551 = sbr.rel (%p549) target = $region32
        $region31: #{tpu_custom_call.1} parent=27 // pred_region
          %s552 = smul.u32 4, %s21
          %s553 = smul.u32 2, %s20
          %555 = vsyncadd %s545, 0
          %s556 = smul.addr %s552, 4
          %s557 = sadd.s32 %s553, %s556
          %s558 = smul.addr %s557, 4
          %s559 = scalar_lea.hbm %s2, %s558
          %s560 = sshll.u32 %s548, 4
          %s561 = int_to_ptr.vmem [resolvable:$true] %s560
          %s562 = sshll.u32 %s559, 4
          %s563 = int_to_ptr.hbm [resolvable:$true] %s562
          %568 = dma.vmem_to_hbm [thread:$0]  %s561, 512, %s563, %s545, 128, 256, 8
        $region32: #{tpu_custom_call.1} parent=27 // pred_fallthru
          _
      $region28: #{tpu_custom_call.1} parent=5 // pred_fallthru
        _
      %p569 = scmp.le.s32.totalorder 2, %s11
      // Predicated region
      $region33: #{tpu_custom_call.1} parent=5 // pred_check
        %p570 = pneg %p569
      $region34: #{tpu_custom_call.1} parent=5 // pred_check_branch
        %572 = sbr.rel (%p570) target = $region36
      $region35: #{tpu_custom_call.1} parent=5 // pred_region
        %s573 = ssub.s32 %s11, 2
        // Predicated region
        $region37: #{tpu_custom_call.1} parent=35 // pred_check
          %p574 = pneg %p101
        $region38: #{tpu_custom_call.1} parent=35 // pred_check_branch
          %576 = sbr.rel (%p574) target = $region40
        $region39: #{tpu_custom_call.1} parent=35 // pred_region
          %s577 = sand.u32 %s86, 1
          %s578 = scalar_lea.sflag [#allocation3], %s577
          %s579 = sand.u32 %s86, 1
          %s580 = smul.addr %s579, 32
          %s581 = scalar_lea.vmem [#allocation2], %s580
          %583 = dma.done %s578, 512
        $region40: #{tpu_custom_call.1} parent=35 // pred_fallthru
          _
      $region36: #{tpu_custom_call.1} parent=5 // pred_fallthru
        _
    $region6: #{tpu_custom_call.1} parent=1 // loop_footer
      %s15 = sadd.s32 1, %s11
    $region7: #{tpu_custom_call.1} parent=1 // loop_footer_branch
      %10 = sbr.rel target = $region3
    $region8: #{tpu_custom_call.1} parent=1 // loop_exit
      _
    %584 = vsyncpa [#allocation3], 1
    %s585 = scalar_lea.sflag [#allocation3], 1
    %586 = vsyncpa %s585, 1

</llo_original>
